<compile_context>
chip_gen: v6e
topology: v6e:2x2x1
jax: 0.10.0
libtpu: 0.0.40
codegen_flags: <defaults>
</compile_context>

<pallas_src>
import functools

import jax
import jax.numpy as jnp
from jax.experimental import pallas as pl
from jax.experimental.pallas import tpu as pltpu


def _round_up(x, m):
    return ((x + m - 1) // m) * m


def _tpu_defaults():
    """Per-generation (num_parts, target_tile_b, vmem_budget, vmem_ceiling)."""
    kind = ""
    try:
        kind = jax.devices()[0].device_kind.lower()
    except Exception:
        pass
    if "v7" in kind:
        # Dual TensorCore (megacore split pays off), but only 64 MiB physical
        # VMEM per TC and a 3.2 TB/s HBM path: modest batch tile so the
        # (tile_b, 1) per-row epilogue doesn't spill past the 64-vreg file.
        return 2, 512, 20 * 1024 * 1024, 40 * 1024 * 1024
    if "v6" in kind:
        # Single TensorCore, 32 MiB default scoped VMEM, 128 MiB physical.
        return 1, 1024, 24 * 1024 * 1024, 48 * 1024 * 1024
    # v5e / unknown: single TensorCore; the explicit vmem_limit_bytes lets us
    # exceed the 16 MiB default scoped limit (physical VMEM is 128 MiB).
    return 1, 1024, 20 * 1024 * 1024, 48 * 1024 * 1024


def _contrastive_loss_kernel(x0_ref, x1_ref, y_ref, out_ref, acc_ref, *,
                             margin, n_rows, tile_b, tiles_per_part, scale):
    part = pl.program_id(0)   # "parallel" axis (megacore split on v7x)
    step = pl.program_id(1)   # "arbitrary" reduction axis over batch tiles

    @pl.when(step == 0)
    def _():
        acc_ref[...] = jnp.zeros_like(acc_ref)

    # Cast after the DMA so the bytes moved from HBM stay in the storage dtype.
    x0 = x0_ref[...].astype(jnp.float32)                      # (tile_b, D)
    x1 = x1_ref[...].astype(jnp.float32)                      # (tile_b, D)
    y = y_ref[...].astype(jnp.float32)                        # (tile_b, 1)

    diff = x0 - x1
    dist_sq = jnp.sum(diff * diff, axis=1, keepdims=True)     # (tile_b, 1)
    dist = jnp.sqrt(dist_sq)
    mdist = jnp.maximum(margin - dist, 0.0)                   # clamp(margin-d, 0)
    loss = y * dist_sq + (1.0 - y) * (mdist * mdist)          # (tile_b, 1)

    row0 = (part * tiles_per_part + step) * tile_b

    # Interior (full) tiles: no masking work at all.
    @pl.when(row0 + tile_b <= n_rows)
    def _():
        acc_ref[...] += jnp.sum(loss, keepdims=True) * scale

    # Ragged last tile / clamped idle tile: mask rows past the real batch.
    # NOTE: select semantics (jnp.where), never multiplicative masking, so
    # garbage/NaN in out-of-range rows cannot propagate into the sum.
    @pl.when(row0 + tile_b > n_rows)
    def _():
        rows = row0 + jax.lax.broadcasted_iota(jnp.int32, (tile_b, 1), 0)
        masked = jnp.where(rows < n_rows, loss, 0.0)
        acc_ref[...] += jnp.sum(masked, keepdims=True) * scale

    # Single unmasked lane-dense (8, 128) store per part, on the final step.
    @pl.when(step == tiles_per_part - 1)
    def _():
        out_ref[...] = jnp.broadcast_to(acc_ref[...].reshape(1, 1, 1),
                                        out_ref.shape)


def contrastive_loss(x0, x1, y, margin=1.0, *, num_parts=None,
                     target_tile_b=None, vmem_budget_bytes=None):
    """Pallas TPU implementation of ContrastiveLoss.forward(x0, x1, y)."""
    B, D = x0.shape
    y2 = y.reshape(B, 1).astype(jnp.float32)

    d_parts, d_tile, d_budget, vmem_ceiling = _tpu_defaults()
    num_parts = d_parts if num_parts is None else num_parts
    target_tile_b = d_tile if target_tile_b is None else target_tile_b
    vmem_budget_bytes = d_budget if vmem_budget_bytes is None else vmem_budget_bytes

    it0 = jnp.dtype(x0.dtype).itemsize
    it1 = jnp.dtype(x1.dtype).itemsize
    # Native sublane packing of the narrowest streamed dtype:
    # f32 -> 8 rows, bf16 -> 16, int8/fp8 -> 32.
    pack = 8 * max(1, 4 // max(1, min(it0, it1, 4)))

    # Honest per-row VMEM cost: both inputs double-buffered, plus the y tile
    # whose lane dim is padded to 128 (2 buffers x 512 B/row).
    bytes_per_row = 2 * (it0 + it1) * D + 2 * 128 * 4
    max_tile_b = max(pack, (vmem_budget_bytes // bytes_per_row) // pack * pack)
    tile_cap = max(pack, min(_round_up(target_tile_b, pack), max_tile_b))

    if B <= pack:
        num_parts = 1
        tiles_per_part = 1
        tile_b = B          # block equal to the full (small) batch dim is legal
    else:
        rows_per_part = pl.cdiv(B, num_parts)
        # Smallest tile count per part that fits the VMEM cap; total block
        # count stays an exact multiple of num_parts so both v7x cores get an
        # equal number of steps.
        tiles_per_part = pl.cdiv(rows_per_part, tile_cap)
        tile_b = _round_up(pl.cdiv(rows_per_part, tiles_per_part), pack)

    last_block = pl.cdiv(B, tile_b) - 1

    def row_map(part, step):
        # Clamp so a fully out-of-range block (idle tail) just re-reads the
        # last real block; the in-kernel row mask zeroes its contribution.
        return (jnp.minimum(part * tiles_per_part + step, last_block), 0)

    kernel = functools.partial(
        _contrastive_loss_kernel,
        margin=float(margin), n_rows=B, tile_b=tile_b,
        tiles_per_part=tiles_per_part, scale=0.5 / float(B))

    # Explicit VMEM limit from the real working set plus headroom, capped per
    # generation (v7x has only 64 MiB physical VMEM per TensorCore).
    working_set = (2 * tile_b * D * (it0 + it1)      # double-buffered x0 / x1
                   + 2 * tile_b * 128 * 4            # y tile, lane-padded
                   + 2 * 8 * 128 * 4                 # resident output block
                   + 4)                              # (1, 1) accumulator scratch
    vmem_limit = int(min(vmem_ceiling,
                         max(working_set + 4 * 1024 * 1024, 16 * 1024 * 1024)))

    cost = pl.CostEstimate(
        flops=B * (3 * D + 10),
        transcendentals=B,                             # one sqrt per row
        bytes_accessed=B * D * (it0 + it1) + B * 4 + num_parts * 8 * 128 * 4)

    partials = pl.pallas_call(
        kernel,
        out_shape=jax.ShapeDtypeStruct((num_parts, 8, 128), jnp.float32),
        grid_spec=pltpu.PrefetchScalarGridSpec(
            num_scalar_prefetch=0,
            grid=(num_parts, tiles_per_part),
            in_specs=[
                pl.BlockSpec((tile_b, D), row_map),
                pl.BlockSpec((tile_b, D), row_map),
                pl.BlockSpec((tile_b, 1), row_map),
            ],
            out_specs=pl.BlockSpec((1, 8, 128), lambda part, step: (part, 0, 0)),
            scratch_shapes=[pltpu.VMEM((1, 1), jnp.float32)],
        ),
        compiler_params=pltpu.CompilerParams(
            dimension_semantics=("parallel", "arbitrary"),
            vmem_limit_bytes=vmem_limit),
        cost_estimate=cost,
    )(x0, x1, y2)

    # Every element of a part's (8, 128) block holds that part's scaled sum.
    return jnp.sum(partials[:, 0, 0])


def _reference(x0, x1, y, margin=1.0):
    # Pure-JAX reference mirroring the PyTorch module exactly.
    diff = x0 - x1
    dist_sq = jnp.sum(diff ** 2, axis=1)
    dist = jnp.sqrt(dist_sq)
    mdist = jnp.maximum(margin - dist, 0.0)
    loss = y * dist_sq + (1.0 - y) * mdist ** 2
    return jnp.sum(loss) / 2.0 / x0.shape[0]


if __name__ == "__main__":
    B, D = 8, 32
    margin = 1.0

    key = jax.random.PRNGKey(0)
    k0, k1, ky = jax.random.split(key, 3)
    x0 = jax.random.normal(k0, (B, D), dtype=jnp.float32)
    x1 = jax.random.normal(k1, (B, D), dtype=jnp.float32)
    y = jax.random.bernoulli(ky, 0.5, (B,)).astype(jnp.float32)

    out = contrastive_loss(x0, x1, y, margin=margin)
    out = jax.block_until_ready(out)

    ref = _reference(x0, x1, y, margin=margin)
    assert jnp.allclose(out, ref, rtol=1e-5, atol=1e-5), (out, ref)

    print("KERNEL_OK")
</pallas_src>

<mosaic_0001>
module attributes {stable_mosaic.version = 11 : i64} {
  func.func @_contrastive_loss_kernel(%arg0: i32, %arg1: i32, %arg2: memref<8x32xf32, #tpu.memory_space<vmem>>, %arg3: memref<8x32xf32, #tpu.memory_space<vmem>>, %arg4: memref<8x1xf32, #tpu.memory_space<vmem>>, %arg5: memref<1x8x128xf32, #tpu.memory_space<vmem>>, %arg6: memref<1x1xf32, #tpu.memory_space<vmem>>) attributes {dimension_semantics = [#tpu.dimension_semantics<parallel>, #tpu.dimension_semantics<arbitrary>], iteration_bounds = array<i64: 1, 1>, scalar_prefetch = 0 : i64, scratch_operands = 1 : i64, tpu.core_type = #tpu.core_type<tc>, window_params = [{transform_indices = @transform_0, window_bounds = array<i64: 8, 32>}, {transform_indices = @transform_1, window_bounds = array<i64: 8, 32>}, {transform_indices = @transform_2, window_bounds = array<i64: 8, 1>}, {transform_indices = @transform_3, window_bounds = array<i64: 1, 8, 128>}]} {
    %c0_i32 = arith.constant 0 : i32
    %0 = arith.cmpi eq, %arg1, %c0_i32 : i32
    %1 = arith.extui %0 : i1 to i32
    %c0_i32_0 = arith.constant 0 : i32
    %2 = arith.cmpi ne, %1, %c0_i32_0 : i32
    scf.if %2 {
      %cst_17 = arith.constant 0.000000e+00 : f32
      %35 = vector.broadcast %cst_17 : f32 to vector<1x1xf32>
      %c0_18 = arith.constant 0 : index
      %c0_19 = arith.constant 0 : index
      %36 = vector.load %arg6[%c0_18, %c0_19] : memref<1x1xf32, #tpu.memory_space<vmem>>, vector<1x1xf32>
      tpu.vector_store %arg6[%c0_18, %c0_19], %35 {strides = array<i32>} : memref<1x1xf32, #tpu.memory_space<vmem>>, vector<1x1xf32>,
    } else {
    }
    %c0 = arith.constant 0 : index
    %c0_1 = arith.constant 0 : index
    %3 = vector.load %arg2[%c0, %c0_1] : memref<8x32xf32, #tpu.memory_space<vmem>>, vector<8x32xf32>
    %c0_2 = arith.constant 0 : index
    %c0_3 = arith.constant 0 : index
    %4 = vector.load %arg3[%c0_2, %c0_3] : memref<8x32xf32, #tpu.memory_space<vmem>>, vector<8x32xf32>
    %c0_4 = arith.constant 0 : index
    %c0_5 = arith.constant 0 : index
    %5 = vector.load %arg4[%c0_4, %c0_5] : memref<8x1xf32, #tpu.memory_space<vmem>>, vector<8x1xf32>
    %6 = arith.subf %3, %4 : vector<8x32xf32>
    %7 = arith.mulf %6, %6 : vector<8x32xf32>
    %cst = arith.constant dense<0.000000e+00> : vector<8xf32>
    %8 = vector.multi_reduction <add>, %7, %cst [1] : vector<8x32xf32> to vector<8xf32>
    %9 = vector.shape_cast %8 : vector<8xf32> to vector<8x1xf32>
    %10 = math.sqrt %9 : vector<8x1xf32>
    %cst_6 = arith.constant 1.000000e+00 : f32
    %11 = vector.broadcast %cst_6 : f32 to vector<8x1xf32>
    %12 = arith.subf %11, %10 : vector<8x1xf32>
    %cst_7 = arith.constant 0.000000e+00 : f32
    %13 = vector.broadcast %cst_7 : f32 to vector<8x1xf32>
    %14 = arith.maximumf %12, %13 : vector<8x1xf32>
    %15 = arith.mulf %5, %9 : vector<8x1xf32>
    %cst_8 = arith.constant 1.000000e+00 : f32
    %16 = vector.broadcast %cst_8 : f32 to vector<8x1xf32>
    %17 = arith.subf %16, %5 : vector<8x1xf32>
    %18 = arith.mulf %14, %14 : vector<8x1xf32>
    %19 = arith.mulf %17, %18 : vector<8x1xf32>
    %20 = arith.addf %15, %19 : vector<8x1xf32>
    %c1_i32 = arith.constant 1 : i32
    %21 = arith.muli %arg0, %c1_i32 : i32
    %22 = arith.addi %21, %arg1 : i32
    %c8_i32 = arith.constant 8 : i32
    %23 = arith.muli %22, %c8_i32 : i32
    %c8_i32_9 = arith.constant 8 : i32
    %24 = arith.addi %23, %c8_i32_9 : i32
    %c8_i32_10 = arith.constant 8 : i32
    %25 = arith.cmpi sle, %24, %c8_i32_10 : i32
    %26 = arith.extui %25 : i1 to i32
    %c0_i32_11 = arith.constant 0 : i32
    %27 = arith.cmpi ne, %26, %c0_i32_11 : i32
    scf.if %27 {
      %c0_17 = arith.constant 0 : index
      %c0_18 = arith.constant 0 : index
      %35 = vector.load %arg6[%c0_17, %c0_18] : memref<1x1xf32, #tpu.memory_space<vmem>>, vector<1x1xf32>
      %36 = vector.shape_cast %20 : vector<8x1xf32> to vector<1x8x1xf32>
      %cst_19 = arith.constant dense<0.000000e+00> : vector<1xf32>
      %37 = vector.multi_reduction <add>, %36, %cst_19 [1, 2] : vector<1x8x1xf32> to vector<1xf32>
      %38 = vector.shape_cast %37 : vector<1xf32> to vector<1x1x1xf32>
      %39 = vector.extract %38[0, 0, 0] : f32 from vector<1x1x1xf32>
      %40 = vector.broadcast %39 : f32 to vector<1x1xf32>
      %cst_20 = arith.constant 6.250000e-02 : f32
      %41 = vector.broadcast %cst_20 : f32 to vector<1x1xf32>
      %42 = arith.mulf %40, %41 : vector<1x1xf32>
      %43 = arith.addf %35, %42 : vector<1x1xf32>
      %c0_21 = arith.constant 0 : index
      %c0_22 = arith.constant 0 : index
      %44 = vector.load %arg6[%c0_21, %c0_22] : memref<1x1xf32, #tpu.memory_space<vmem>>, vector<1x1xf32>
      tpu.vector_store %arg6[%c0_21, %c0_22], %43 {strides = array<i32>} : memref<1x1xf32, #tpu.memory_space<vmem>>, vector<1x1xf32>,
    } else {
    }
    %c8_i32_12 = arith.constant 8 : i32
    %28 = arith.addi %23, %c8_i32_12 : i32
    %c8_i32_13 = arith.constant 8 : i32
    %29 = arith.cmpi sgt, %28, %c8_i32_13 : i32
    %30 = arith.extui %29 : i1 to i32
    %c0_i32_14 = arith.constant 0 : i32
    %31 = arith.cmpi ne, %30, %c0_i32_14 : i32
    scf.if %31 {
      %35 = tpu.iota {dimensions = array<i32: 0>} : vector<8x1xi32>
      %36 = vector.broadcast %23 : i32 to vector<8x1xi32>
      %37 = arith.addi %36, %35 : vector<8x1xi32>
      %c8_i32_17 = arith.constant 8 : i32
      %38 = vector.broadcast %c8_i32_17 : i32 to vector<8x1xi32>
      %39 = arith.cmpi slt, %37, %38 : vector<8x1xi32>
      %cst_18 = arith.constant 0.000000e+00 : f32
      %40 = vector.broadcast %cst_18 : f32 to vector<8x1xf32>
      %41 = arith.select %39, %20, %40 : vector<8x1xi1>, vector<8x1xf32>
      %c0_19 = arith.constant 0 : index
      %c0_20 = arith.constant 0 : index
      %42 = vector.load %arg6[%c0_19, %c0_20] : memref<1x1xf32, #tpu.memory_space<vmem>>, vector<1x1xf32>
      %43 = vector.shape_cast %41 : vector<8x1xf32> to vector<1x8x1xf32>
      %cst_21 = arith.constant dense<0.000000e+00> : vector<1xf32>
      %44 = vector.multi_reduction <add>, %43, %cst_21 [1, 2] : vector<1x8x1xf32> to vector<1xf32>
      %45 = vector.shape_cast %44 : vector<1xf32> to vector<1x1x1xf32>
      %46 = vector.extract %45[0, 0, 0] : f32 from vector<1x1x1xf32>
      %47 = vector.broadcast %46 : f32 to vector<1x1xf32>
      %cst_22 = arith.constant 6.250000e-02 : f32
      %48 = vector.broadcast %cst_22 : f32 to vector<1x1xf32>
      %49 = arith.mulf %47, %48 : vector<1x1xf32>
      %50 = arith.addf %42, %49 : vector<1x1xf32>
      %c0_23 = arith.constant 0 : index
      %c0_24 = arith.constant 0 : index
      %51 = vector.load %arg6[%c0_23, %c0_24] : memref<1x1xf32, #tpu.memory_space<vmem>>, vector<1x1xf32>
      tpu.vector_store %arg6[%c0_23, %c0_24], %50 {strides = array<i32>} : memref<1x1xf32, #tpu.memory_space<vmem>>, vector<1x1xf32>,
    } else {
    }
    %c0_i32_15 = arith.constant 0 : i32
    %32 = arith.cmpi eq, %arg1, %c0_i32_15 : i32
    %33 = arith.extui %32 : i1 to i32
    %c0_i32_16 = arith.constant 0 : i32
    %34 = arith.cmpi ne, %33, %c0_i32_16 : i32
    scf.if %34 {
      %c0_17 = arith.constant 0 : index
      %c0_18 = arith.constant 0 : index
      %35 = vector.load %arg6[%c0_17, %c0_18] : memref<1x1xf32, #tpu.memory_space<vmem>>, vector<1x1xf32>
      %36 = vector.shape_cast %35 : vector<1x1xf32> to vector<1x1x1xf32>
      %37 = vector.shape_cast %36 : vector<1x1x1xf32> to vector<1x1x1xf32>
      %38 = vector.broadcast %37 : vector<1x1x1xf32> to vector<1x8x128xf32>
      %c0_19 = arith.constant 0 : index
      %c0_20 = arith.constant 0 : index
      %c0_21 = arith.constant 0 : index
      %39 = vector.load %arg5[%c0_19, %c0_20, %c0_21] : memref<1x8x128xf32, #tpu.memory_space<vmem>>, vector<1x8x128xf32>
      tpu.vector_store %arg5[%c0_19, %c0_20, %c0_21], %38 {strides = array<i32>} : memref<1x8x128xf32, #tpu.memory_space<vmem>>, vector<1x8x128xf32>,
    } else {
    }
    return
  }
  func.func @transform_0(%arg0: i32, %arg1: i32) -> (i32, i32) {
    %c1_i32 = arith.constant 1 : i32
    %0 = arith.muli %arg0, %c1_i32 : i32
    %1 = arith.addi %0, %arg1 : i32
    %c0_i32 = arith.constant 0 : i32
    %2 = arith.minsi %1, %c0_i32 : i32
    %c0_i32_0 = arith.constant 0 : i32
    %c0_i32_1 = arith.constant 0 : i32
    return %2, %c0_i32_0 : i32, i32
  }
  func.func @transform_1(%arg0: i32, %arg1: i32) -> (i32, i32) {
    %c1_i32 = arith.constant 1 : i32
    %0 = arith.muli %arg0, %c1_i32 : i32
    %1 = arith.addi %0, %arg1 : i32
    %c0_i32 = arith.constant 0 : i32
    %2 = arith.minsi %1, %c0_i32 : i32
    %c0_i32_0 = arith.constant 0 : i32
    %c0_i32_1 = arith.constant 0 : i32
    return %2, %c0_i32_0 : i32, i32
  }
  func.func @transform_2(%arg0: i32, %arg1: i32) -> (i32, i32) {
    %c1_i32 = arith.constant 1 : i32
    %0 = arith.muli %arg0, %c1_i32 : i32
    %1 = arith.addi %0, %arg1 : i32
    %c0_i32 = arith.constant 0 : i32
    %2 = arith.minsi %1, %c0_i32 : i32
    %c0_i32_0 = arith.constant 0 : i32
    %c0_i32_1 = arith.constant 0 : i32
    return %2, %c0_i32_0 : i32, i32
  }
  func.func @transform_3(%arg0: i32, %arg1: i32) -> (i32, i32, i32) {
    %c0_i32 = arith.constant 0 : i32
    %c0_i32_0 = arith.constant 0 : i32
    %c0_i32_1 = arith.constant 0 : i32
    return %arg0, %c0_i32, %c0_i32_0 : i32, i32, i32
  }
}

</mosaic_0001>

<llo_original>
// kernel: tpu_custom_call.1
$region0: #{tpu_custom_call.1}
  #allocation0 [shape = 'u32[]', space=smem, size = 0x4, offset = 0x4, fixed_abs, tag = 'smem constant byte address 0x4 - core index']
  #allocation1 [shape = 'u32[144,128]{1,0:T(1,128)}', space=vmem, size = 0x12000, scoped, tag = 'internal scratch']
  #allocation2 [shape = 'f32[1,1]{1,0:T(1,128)}', space=vmem, size = 0x200, scoped, tag = 'scratch operand']
  %s0 = inlined_call_operand.vmem [shape: f32[8,32], index: 0, kind: input, shape index: {}]
  %s1 = inlined_call_operand.hbm [shape: f32[8,32], index: 1, kind: input, shape index: {}]
  %s2 = inlined_call_operand.vmem [shape: f32[8,1], index: 2, kind: input, shape index: {}]
  %s3 = inlined_call_operand.hbm [shape: f32[1,8,128], index: 3, kind: output, shape index: {}]
  %s4 = sld [smem:[#allocation0]]
  $region42: #{tpu_custom_call.1} parent=0
    _
  %s6 = ssub.s32 1, %s4
  %s7 = scalar_select 0, %s6, %s4
  $region1: #{tpu_custom_call.1} parent=0
    #allocation3 [shape = 'u8[4096]{0}', space=vmem, size = 0x1000, scoped, tag = 'input window, operand 1, single buffered']
    #allocation4 [shape = 's32[1]{0}', space=sflag, size = 0x4, scoped, tag = 'scoped memory for tpu_custom_call.1']
    #allocation5 [shape = 's32[1]{0}', space=sflag, size = 0x4, scoped, tag = 'scoped memory for tpu_custom_call.1']
    #allocation6 [shape = 'u8[4096]{0}', space=vmem, size = 0x1000, scoped, tag = 'output window, operand 0, single buffered']
    %8 = vsyncpa [#allocation4], 0
    %9 = vsyncpa [#allocation5], 0
    // Predicated region
    $region2: #{tpu_custom_call.1} parent=1 // pred_check
      _
    $region3: #{tpu_custom_call.1} parent=1 // pred_check_branch
      %11 = sbr.rel (0) target = $region5
    $region4: #{tpu_custom_call.1} parent=1 // pred_region
      %s12 = sadd.s32 0, 0
      %p13 = scmp.lt.s32.totalorder %s12, 0
      %s14 = scalar_select %p13, %s12, 0
      %p15 = scmp.lt.s32.totalorder %s14, 0
      %s16 = scalar_select %p15, %s14, 0
      %s17 = smul.addr %s16, 8
      %s18 = scalar_lea.vmem %s0, %s17
      %s19 = sadd.s32 0, 0
      %p20 = scmp.lt.s32.totalorder %s19, 0
      %s21 = scalar_select %p20, %s19, 0
    $region5: #{tpu_custom_call.1} parent=1 // pred_fallthru
      _
    // Predicated region
    $region6: #{tpu_custom_call.1} parent=1 // pred_check
      _
    $region7: #{tpu_custom_call.1} parent=1 // pred_check_branch
      %23 = sbr.rel (0) target = $region9
    $region8: #{tpu_custom_call.1} parent=1 // pred_region
      %s24 = sadd.s32 0, 0
      %p25 = scmp.lt.s32.totalorder %s24, 0
      %s26 = scalar_select %p25, %s24, 0
      %s28 = ssub.s32 128, 128
      %29 = vsyncadd [#allocation4], %s28
      %s30 = smul.addr %s26, 128
      %s31 = scalar_lea.hbm %s1, %s30
      %s33 = sshll.u32 [#allocation3], 4
      %s34 = int_to_ptr.vmem [resolvable:$true] %s33
      %36 = dma.hbm_to_vmem [thread:$0]  %s31, 128, %s34, [#allocation4]
    $region9: #{tpu_custom_call.1} parent=1 // pred_fallthru
      _
    // Predicated region
    $region10: #{tpu_custom_call.1} parent=1 // pred_check
      _
    $region11: #{tpu_custom_call.1} parent=1 // pred_check_branch
      %38 = sbr.rel (0) target = $region13
    $region12: #{tpu_custom_call.1} parent=1 // pred_region
      %s39 = sadd.s32 0, 0
      %p40 = scmp.lt.s32.totalorder %s39, 0
      %s41 = scalar_select %p40, %s39, 0
      %p42 = scmp.lt.s32.totalorder %s41, 0
      %s43 = scalar_select %p42, %s41, 0
      %s44 = smul.addr %s43, 8
      %s45 = scalar_lea.vmem %s2, %s44
      %s46 = sadd.s32 0, 0
      %p47 = scmp.lt.s32.totalorder %s46, 0
      %s48 = scalar_select %p47, %s46, 0
    $region13: #{tpu_custom_call.1} parent=1 // pred_fallthru
      _
    // Predicated region
    $region14: #{tpu_custom_call.1} parent=1 // pred_check
      _
    $region15: #{tpu_custom_call.1} parent=1 // pred_check_branch
      %50 = sbr.rel (0) target = $region17
    $region16: #{tpu_custom_call.1} parent=1 // pred_region
      %51 = dma.done [#allocation4], 128
    $region17: #{tpu_custom_call.1} parent=1 // pred_fallthru
      _
    %s52 = sadd.s32 0, 0
    %p53 = scmp.lt.s32.totalorder %s52, 0
    %s54 = scalar_select %p53, %s52, 0
    %p55 = scmp.lt.s32.totalorder %s54, 0
    %s56 = scalar_select %p55, %s54, 0
    %s57 = smul.addr %s56, 8
    %s58 = scalar_lea.vmem %s0, %s57
    %s59 = sadd.s32 0, 0
    %p60 = scmp.lt.s32.totalorder %s59, 0
    %s61 = scalar_select %p60, %s59, 0
    %p62 = scmp.lt.s32.totalorder %s61, 0
    %s63 = scalar_select %p62, %s61, 0
    %s64 = smul.addr %s63, 8
    %s65 = scalar_lea.vmem %s2, %s64
    %s66 = sadd.s32 0, 0
    %p67 = scmp.lt.s32.totalorder %s66, 0
    %s68 = scalar_select %p67, %s66, 0
    %p69 = scmp.lt.s32.totalorder %s68, 0
    %s70 = scalar_select %p69, %s68, 0
    %s71 = smul.addr %s70, 8
    %s72 = scalar_lea.vmem %s0, %s71
    %s73 = sadd.s32 0, 0
    %p74 = scmp.lt.s32.totalorder %s73, 0
    %s75 = scalar_select %p74, %s73, 0
    %s76 = sadd.s32 0, 0
    %p77 = scmp.lt.s32.totalorder %s76, 0
    %s78 = scalar_select %p77, %s76, 0
    %s79 = sadd.s32 0, 0
    %p80 = scmp.lt.s32.totalorder %s79, 0
    %s81 = scalar_select %p80, %s79, 0
    %p82 = scmp.lt.s32.totalorder %s81, 0
    %s83 = scalar_select %p82, %s81, 0
    %s84 = smul.addr %s83, 8
    %s85 = scalar_lea.vmem %s2, %s84
    %s86 = sadd.s32 0, 0
    %p87 = scmp.lt.s32.totalorder %s86, 0
    %s88 = scalar_select %p87, %s86, 0
    %p89 = scmp.eq.s32.totalorder 0, 0
    // Predicated region
    $region18: #{tpu_custom_call.1} parent=1 // pred_check
      %p90 = pneg %p89
    $region19: #{tpu_custom_call.1} parent=1 // pred_check_branch
      %92 = sbr.rel (%p90) target = $region21
    $region20: #{tpu_custom_call.1} parent=1 // pred_region
      %vm93 = vcmask 0
      %94 = vst.msk [vmem:[#allocation2] sm:$0x1] %vm93, 0.0
    $region21: #{tpu_custom_call.1} parent=1 // pred_fallthru
      _
    %v95 = vld [vmem:[%s72] sm:$0xff]
    %v96 = vld [vmem:[#allocation3] sm:$0xff]
    %v97 = vld [vmem:[%s85] sm:$0xff]
    %v98 = vsub.f32 %v95, %v96
    %v99 = vmul.f32 %v98, %v98
    %vm100 = vcmask 261120
    %v101 = vsel %vm100, %v99, 0.0
    %102 = vadd.xlane.f32.xlu0 %v101
    %v103 = vpop.xlane.xlu0 %102
    %v104 = vrsqrt.pop %v103
    %v105 = vmul.f32 %v103, %v104
    %vm106 = vcmp.eq.f32.partialorder %v103, inf
    %v107 = vsel %vm106, %v103, %v105
    %vm108 = vcmp.eq.f32.partialorder %v103, 0.0
    %v109 = vand.u32 %v103, 2147483648
    %v110 = vsel %vm108, %v109, %v107
    %v111 = vsub.f32 1.0, %v110
    %v112 = vmax.f32 %v111, 0.0
    %v113 = vmul.f32 %v97, %v103
    %v114 = vsub.f32 1.0, %v97
    %v115 = vmul.f32 %v112, %v112
    %v116 = vmul.f32 %v114, %v115
    %v117 = vadd.f32 %v113, %v116
    %s118 = sadd.s32 0, 0
    %s119 = smul.u32 %s118, 8
    %s120 = sadd.s32 %s119, 8
    %p121 = scmp.le.s32.totalorder %s120, 8
    // Predicated region
    $region22: #{tpu_custom_call.1} parent=1 // pred_check
      %p122 = pneg %p121
    $region23: #{tpu_custom_call.1} parent=1 // pred_check_branch
      %124 = sbr.rel (%p122) target = $region25
    $region24: #{tpu_custom_call.1} parent=1 // pred_region
      %v125 = vld [vmem:[#allocation2] sm:$0x1]
      %vm126 = vcmask 7168
      %v127 = vsel %vm126, %v117, 0.0
      %128 = vadd.xlane.f32.xlu0 %v127
      %v129 = vpop.xlane.xlu0 %128
      %v130 = vrot.slane %v129, 4
      %v131 = vadd.f32 %v129, %v130
      %v132 = vrot.slane %v131, 2
      %v133 = vadd.f32 %v131, %v132
      %v134 = vrot.slane %v133, 1
      %v135 = vadd.f32 %v133, %v134
      %s136 = vtos %v135
      %v137 = vstv %s136
      %v138 = vmul.f32 %v137, 0.0625
      %v139 = vadd.f32 %v125, %v138
      %vm140 = vcmask 0
      %141 = vst.msk [vmem:[#allocation2] sm:$0x1] %vm140, %v139
    $region25: #{tpu_custom_call.1} parent=1 // pred_fallthru
      _
    %p142 = scmp.gt.s32.totalorder %s120, 8
    // Predicated region
    $region26: #{tpu_custom_call.1} parent=1 // pred_check
      %p143 = pneg %p142
    $region27: #{tpu_custom_call.1} parent=1 // pred_check_branch
      %145 = sbr.rel (%p143) target = $region29
    $region28: #{tpu_custom_call.1} parent=1 // pred_region
      %v146 = vlaneseq
      %v147 = vshrl.u32 %v146, 7
      %v148 = vstv %s119
      %v149 = vadd.s32 %v148, %v147
      %vm150 = vcmp.lt.s32.totalorder %v149, 8
      %v151 = vsel %vm150, %v117, 0.0
      %v152 = vld [vmem:[#allocation2] sm:$0x1]
      %vm153 = vcmask 7168
      %v154 = vsel %vm153, %v151, 0.0
      %155 = vadd.xlane.f32.xlu0 %v154
      %v156 = vpop.xlane.xlu0 %155
      %v157 = vrot.slane %v156, 4
      %v158 = vadd.f32 %v156, %v157
      %v159 = vrot.slane %v158, 2
      %v160 = vadd.f32 %v158, %v159
      %v161 = vrot.slane %v160, 1
      %v162 = vadd.f32 %v160, %v161
      %s163 = vtos %v162
      %v164 = vstv %s163
      %v165 = vmul.f32 %v164, 0.0625
      %v166 = vadd.f32 %v152, %v165
      %vm167 = vcmask 0
      %168 = vst.msk [vmem:[#allocation2] sm:$0x1] %vm167, %v166
    $region29: #{tpu_custom_call.1} parent=1 // pred_fallthru
      _
    // Predicated region
    $region30: #{tpu_custom_call.1} parent=1 // pred_check
      %p169 = pneg %p89
    $region31: #{tpu_custom_call.1} parent=1 // pred_check_branch
      %171 = sbr.rel (%p169) target = $region33
    $region32: #{tpu_custom_call.1} parent=1 // pred_region
      %v172 = vld [vmem:[#allocation2] sm:$0x1]
      %v174 = vlaneseq
      %v175 = vshrl.u32 %v174, 7
      %v176 = vsub.s32 0, %v175
      %v177 = vrot.slane %v172, %v176
      %178 = vset.pattern.permute.xlu0 0
      %179 = vperm.xlu0 %178, %v177
      %v180 = vpop.permute.xlu0 %179
      %182 = vst [vmem:[#allocation6] sm:$0xff] %v180
    $region33: #{tpu_custom_call.1} parent=1 // pred_fallthru
      _
    // Predicated region
    $region34: #{tpu_custom_call.1} parent=1 // pred_check
      _
    $region35: #{tpu_custom_call.1} parent=1 // pred_check_branch
      %184 = sbr.rel (0) target = $region37
    $region36: #{tpu_custom_call.1} parent=1 // pred_region
      %s186 = ssub.s32 128, 128
      %187 = vsyncadd [#allocation5], %s186
      %s189 = sshll.u32 [#allocation6], 4
      %s190 = int_to_ptr.vmem [resolvable:$true] %s189
      %192 = dma.vmem_to_hbm [thread:$0]  %s190, 128, %s3, [#allocation5]
    $region37: #{tpu_custom_call.1} parent=1 // pred_fallthru
      _
    // Predicated region
    $region38: #{tpu_custom_call.1} parent=1 // pred_check
      _
    $region39: #{tpu_custom_call.1} parent=1 // pred_check_branch
      %194 = sbr.rel (0) target = $region41
    $region40: #{tpu_custom_call.1} parent=1 // pred_region
      %195 = dma.done [#allocation5], 128
    $region41: #{tpu_custom_call.1} parent=1 // pred_fallthru
      _
    %196 = vsyncpa [#allocation4], 1
    %197 = vsyncpa [#allocation5], 1

</llo_original>
